<compile_context>
chip_gen: v5e
topology: v5e:2x2
jax: 0.10.0
libtpu: 0.0.40
codegen_flags: <defaults>
</compile_context>

<pallas_src>
import jax
import jax.numpy as jnp
from jax.experimental import pallas as pl
from jax.experimental.pallas import tpu as pltpu


def _round_up(v, m):
    return (v + m - 1) // m * m


def _rgcn_kernel(adj_ref, xsrc_ref, xdst_ref, invdeg_ref, w_ref, bias_ref,
                 out_ref, acc_ref):
    k = pl.program_id(1)
    R = adj_ref.shape[0]          # static: block holds all relations
    tm = adj_ref.shape[1]
    tk = adj_ref.shape[2]

    @pl.when(k == 0)
    def _():
        acc_ref[...] = jnp.zeros_like(acc_ref)

    # int8 0/1 adjacency -> bf16 in VMEM (HBM bytes already halved), viewed as
    # one (R*tm, tk) operand: a single MXU push per k-step, full-width f32
    # accumulation into the scratch (no lane-offset slicing in the hot loop).
    a = adj_ref[...].astype(jnp.bfloat16).reshape(R * tm, tk)
    acc_ref[...] += jnp.dot(a, xsrc_ref[...],
                            preferred_element_type=jnp.float32)

    @pl.when(k == pl.num_programs(1) - 1)
    def _():
        inv_deg = invdeg_ref[...]                               # (tm, R) f32
        # Epilogue (once per i-tile): self-loop projection + R normalized
        # per-relation projections, all as bf16 x bf16 MXU dots with f32 acc.
        h = jnp.dot(xdst_ref[...], w_ref[R],
                    preferred_element_type=jnp.float32)
        for r in range(R):
            # norm='right': scale aggregated messages by 1/in-degree
            # (precomputed, clamped at 1 in the wrapper).
            msg = acc_ref[r * tm:(r + 1) * tm, :] * inv_deg[:, r:r + 1]
            h += jnp.dot(msg.astype(jnp.bfloat16), w_ref[r],
                         preferred_element_type=jnp.float32)
        h = h + bias_ref[...]                                   # bias
        h = jnp.maximum(h, 0.0)                                 # relu
        # dropout p = 0.0 -> identity
        out_ref[...] = h.astype(out_ref.dtype)


def rel_graph_conv_layer(adj, x, weights, loop_weight, bias):
    """adj: (R, N, N) f32 0/1; x: (N, F_in); weights: (R, F_in, F_out);
    loop_weight: (F_in, F_out); bias: (F_out,). Returns (N, F_out) f32."""
    R, N_dst, N_src = adj.shape
    assert N_dst == N_src, "this call path uses one homogeneous node set"
    N = N_dst
    F_in = x.shape[1]
    F_out = weights.shape[2]

    # ---- tiling ---------------------------------------------------------------
    # tiles always evenly divide the padded problem; tm is a multiple of 32 so
    # the int8 adjacency block respects packed sublane tiling; the i-axis always
    # has >= 2 tiles (v7x megacore).
    if N <= 1024:
        N_p = _round_up(N, 128)
        tk = N_p
        tm = N_p // 2
    else:
        tm = 512
        tk = 2048 if N >= 4096 else 1024
        # cap the int8 adjacency double-buffer at ~12 MiB so the whole pipeline
        # stays comfortably inside v7x's 64 MiB VMEM (and v5e/v6e budgets).
        budget = 12 * 1024 * 1024
        while 2 * R * tm * tk > budget and tk > 512:
            tk //= 2
        while 2 * R * tm * tk > budget and tm > 128:
            tm //= 2
        N_p = _round_up(N, max(tm, tk))
    F_out_p = _round_up(F_out, 128)             # lane-dense output stores

    # ---- cheap JAX-side prep (tiny next to the adjacency) ---------------------
    deg = jnp.maximum(jnp.sum(adj, axis=2), 1.0)                  # (R, N)
    inv_deg = jnp.pad((1.0 / deg).T, ((0, N_p - N), (0, 0)),
                      constant_values=1.0)                        # (N_p, R)

    # 0/1 adjacency: int8 in HBM (exact), upcast to bf16 inside the kernel.
    adj_i8 = jnp.pad(adj, ((0, 0), (0, N_p - N), (0, N_p - N))
                     ).astype(jnp.int8)
    x_b = jnp.pad(x, ((0, N_p - N), (0, 0))).astype(jnp.bfloat16)

    # [W_0, ..., W_{R-1}, W_loop] stacked along a leading axis; bf16 for the
    # epilogue MXU dots; F_out padded to a 128-lane multiple.
    w_all = jnp.concatenate([weights, loop_weight[None]], axis=0)  # (R+1,Fi,Fo)
    w_all = jnp.pad(w_all, ((0, 0), (0, 0), (0, F_out_p - F_out))
                    ).astype(jnp.bfloat16)
    bias_p = jnp.pad(bias.reshape(1, F_out), ((0, 0), (0, F_out_p - F_out)))

    grid = (N_p // tm, N_p // tk)

    # ---- VMEM budget (explicit on all gens; v5e default is only 16 MiB) -------
    adj_buf = 2 * R * tm * tk                                # int8, 2 buffers
    misc = (2 * (tk + tm) * F_in * 2                         # x_src / x_dst bf16
            + 2 * tm * 128 * 4                               # inv_deg (lane pad)
            + 2 * (R + 1) * F_in * F_out_p * 2               # weights bf16
            + 2 * 8 * F_out_p * 4                            # bias (sublane pad)
            + 2 * tm * F_out_p * 4                           # output f32
            + R * tm * max(F_in, 128) * 4)                   # acc scratch f32
    vmem_limit = int(min(48 * 1024 * 1024,                   # v7x-safe ceiling
                         max(32 * 1024 * 1024, 1.25 * (adj_buf + misc))))

    out = pl.pallas_call(
        _rgcn_kernel,
        out_shape=jax.ShapeDtypeStruct((N_p, F_out_p), jnp.float32),
        grid_spec=pltpu.PrefetchScalarGridSpec(
            num_scalar_prefetch=0,
            grid=grid,
            in_specs=[
                pl.BlockSpec((R, tm, tk), lambda i, k: (0, i, k)),          # adj int8
                pl.BlockSpec((tk, F_in), lambda i, k: (k, 0)),              # x as src
                pl.BlockSpec((tm, F_in), lambda i, k: (i, 0)),              # x as dst
                pl.BlockSpec((tm, R), lambda i, k: (i, 0)),                 # 1/deg
                pl.BlockSpec((R + 1, F_in, F_out_p), lambda i, k: (0, 0, 0)),  # W's
                pl.BlockSpec((1, F_out_p), lambda i, k: (0, 0)),            # bias
            ],
            out_specs=pl.BlockSpec((tm, F_out_p), lambda i, k: (i, 0)),
            scratch_shapes=[pltpu.VMEM((R * tm, F_in), jnp.float32)],
        ),
        compiler_params=pltpu.CompilerParams(
            dimension_semantics=("parallel", "arbitrary"),   # i-tiles across TCs
            vmem_limit_bytes=vmem_limit,
        ),
    )(adj_i8, x_b, x_b, inv_deg, w_all, bias_p)

    return out[:N, :F_out]


def _reference(adj, x, weights, loop_weight, bias):
    deg = jnp.maximum(jnp.sum(adj, axis=2, keepdims=True), 1.0)       # (R, N, 1)
    a_norm = adj / deg
    per_rel = jnp.einsum('rvu,uf->rvf', a_norm, x)
    h = jnp.einsum('rvf,rfo->vo', per_rel, weights)
    h = h + x @ loop_weight + bias
    return jnp.maximum(h, 0.0)


if __name__ == "__main__":
    key = jax.random.PRNGKey(0)
    k_adj, k_x, k_basis, k_comp, k_loop = jax.random.split(key, 5)

    # Small synthetic heterograph: one node type, R edge types (relations).
    N = 32          # number of nodes
    F_in = 16       # in_feat
    F_out = 32      # out_feat
    R = 3           # len(graph.etypes)
    num_bases = 2   # 0 < num_bases < R  -> use_basis = True

    adj = (jax.random.uniform(k_adj, (R, N, N)) < 0.2).astype(jnp.float32)
    x = jax.random.normal(k_x, (N, F_in), dtype=jnp.float32)

    # WeightBasis: basis (num_bases, F_in, F_out) + coefficients (R, num_bases).
    gain = jnp.sqrt(2.0)  # nn.init.calculate_gain('relu')
    basis = gain * jax.random.normal(k_basis, (num_bases, F_in, F_out),
                                     dtype=jnp.float32) * 0.1
    coeff = jax.random.normal(k_comp, (R, num_bases), dtype=jnp.float32)
    weights = jnp.einsum('rb,bio->rio', coeff, basis)                 # W_r per etype

    loop_weight = gain * jax.random.normal(k_loop, (F_in, F_out),
                                           dtype=jnp.float32) * 0.1
    bias = jnp.zeros((F_out,), dtype=jnp.float32)                     # h_bias (zeros)

    out = rel_graph_conv_layer(adj, x, weights, loop_weight, bias)
    out = jax.block_until_ready(out)

    ref = _reference(adj, x, weights, loop_weight, bias)
    assert out.shape == (N, F_out)
    # Tolerance accounts for the bf16 cast of node features, aggregated
    # messages and projection weights feeding the MXU (adjacency itself is
    # exact as int8 0/1).
    assert jnp.allclose(out, ref, atol=5e-2, rtol=5e-2), \
        float(jnp.max(jnp.abs(out - ref)))

    print("KERNEL_OK")
</pallas_src>

<mosaic_0001>
module attributes {stable_mosaic.version = 11 : i64} {
  func.func @_rgcn_kernel(%arg0: i32, %arg1: i32, %arg2: memref<3x64x128xi8, #tpu.memory_space<vmem>>, %arg3: memref<128x16xbf16, #tpu.memory_space<vmem>>, %arg4: memref<64x16xbf16, #tpu.memory_space<vmem>>, %arg5: memref<64x3xf32, #tpu.memory_space<vmem>>, %arg6: memref<4x16x128xbf16, #tpu.memory_space<vmem>>, %arg7: memref<1x128xf32, #tpu.memory_space<vmem>>, %arg8: memref<64x128xf32, #tpu.memory_space<vmem>>, %arg9: memref<192x16xf32, #tpu.memory_space<vmem>>) attributes {dimension_semantics = [#tpu.dimension_semantics<parallel>, #tpu.dimension_semantics<arbitrary>], iteration_bounds = array<i64: 2, 1>, scalar_prefetch = 0 : i64, scratch_operands = 1 : i64, tpu.core_type = #tpu.core_type<tc>, window_params = [{transform_indices = @transform_0, window_bounds = array<i64: 3, 64, 128>}, {transform_indices = @transform_1, window_bounds = array<i64: 128, 16>}, {transform_indices = @transform_2, window_bounds = array<i64: 64, 16>}, {transform_indices = @transform_3, window_bounds = array<i64: 64, 3>}, {pipeline_mode = #tpu.pipeline_mode<synchronous>, transform_indices = @transform_4, window_bounds = array<i64: 4, 16, 128>}, {pipeline_mode = #tpu.pipeline_mode<synchronous>, transform_indices = @transform_5, window_bounds = array<i64: 1, 128>}, {transform_indices = @transform_6, window_bounds = array<i64: 64, 128>}]} {
    %c0_i32 = arith.constant 0 : i32
    %0 = arith.cmpi eq, %arg1, %c0_i32 : i32
    %1 = arith.extui %0 : i1 to i32
    %c0_i32_0 = arith.constant 0 : i32
    %2 = arith.cmpi ne, %1, %c0_i32_0 : i32
    scf.if %2 {
      %cst_11 = arith.constant 0.000000e+00 : f32
      %14 = vector.broadcast %cst_11 : f32 to vector<192x16xf32>
      %c0_12 = arith.constant 0 : index
      %c0_13 = arith.constant 0 : index
      %15 = vector.load %arg9[%c0_12, %c0_13] : memref<192x16xf32, #tpu.memory_space<vmem>>, vector<192x16xf32>
      tpu.vector_store %arg9[%c0_12, %c0_13], %14 {strides = array<i32>} : memref<192x16xf32, #tpu.memory_space<vmem>>, vector<192x16xf32>,
    } else {
    }
    %c0 = arith.constant 0 : index
    %c0_1 = arith.constant 0 : index
    %c0_2 = arith.constant 0 : index
    %3 = vector.load %arg2[%c0, %c0_1, %c0_2] : memref<3x64x128xi8, #tpu.memory_space<vmem>>, vector<3x64x128xi8>
    %4 = arith.sitofp %3 : vector<3x64x128xi8> to vector<3x64x128xbf16>
    %5 = vector.shape_cast %4 : vector<3x64x128xbf16> to vector<192x128xbf16>
    %c0_3 = arith.constant 0 : index
    %c0_4 = arith.constant 0 : index
    %6 = vector.load %arg9[%c0_3, %c0_4] : memref<192x16xf32, #tpu.memory_space<vmem>>, vector<192x16xf32>
    %c0_5 = arith.constant 0 : index
    %c0_6 = arith.constant 0 : index
    %7 = vector.load %arg3[%c0_5, %c0_6] : memref<128x16xbf16, #tpu.memory_space<vmem>>, vector<128x16xbf16>
    %cst = arith.constant dense<0.000000e+00> : vector<192x16xf32>
    %8 = tpu.matmul %5, %7, %cst {dimension_numbers = #tpu.dot_dimension_numbers<[1], [0], [0], [1], [0, 0, 1, 1], [], []>} : vector<192x128xbf16>, vector<128x16xbf16>, vector<192x16xf32> -> vector<192x16xf32>
    %9 = arith.addf %6, %8 : vector<192x16xf32>
    %c0_7 = arith.constant 0 : index
    %c0_8 = arith.constant 0 : index
    %10 = vector.load %arg9[%c0_7, %c0_8] : memref<192x16xf32, #tpu.memory_space<vmem>>, vector<192x16xf32>
    tpu.vector_store %arg9[%c0_7, %c0_8], %9 {strides = array<i32>} : memref<192x16xf32, #tpu.memory_space<vmem>>, vector<192x16xf32>,
    %c0_i32_9 = arith.constant 0 : i32
    %11 = arith.cmpi eq, %arg1, %c0_i32_9 : i32
    %12 = arith.extui %11 : i1 to i32
    %c0_i32_10 = arith.constant 0 : i32
    %13 = arith.cmpi ne, %12, %c0_i32_10 : i32
    scf.if %13 {
      %c0_11 = arith.constant 0 : index
      %c0_12 = arith.constant 0 : index
      %14 = vector.load %arg5[%c0_11, %c0_12] : memref<64x3xf32, #tpu.memory_space<vmem>>, vector<64x3xf32>
      %c0_13 = arith.constant 0 : index
      %c0_14 = arith.constant 0 : index
      %15 = vector.load %arg4[%c0_13, %c0_14] : memref<64x16xbf16, #tpu.memory_space<vmem>>, vector<64x16xbf16>
      %c3 = arith.constant 3 : index
      %c0_15 = arith.constant 0 : index
      %c0_16 = arith.constant 0 : index
      %16 = vector.load %arg6[%c3, %c0_15, %c0_16] : memref<4x16x128xbf16, #tpu.memory_space<vmem>>, vector<1x16x128xbf16>
      %17 = vector.shape_cast %16 : vector<1x16x128xbf16> to vector<16x128xbf16>
      %cst_17 = arith.constant dense<0.000000e+00> : vector<64x128xf32>
      %18 = tpu.matmul %15, %17, %cst_17 {dimension_numbers = #tpu.dot_dimension_numbers<[1], [0], [0], [1], [0, 0, 1, 1], [], []>} : vector<64x16xbf16>, vector<16x128xbf16>, vector<64x128xf32> -> vector<64x128xf32>
      %c0_18 = arith.constant 0 : index
      %c0_19 = arith.constant 0 : index
      %19 = vector.load %arg9[%c0_18, %c0_19] : memref<192x16xf32, #tpu.memory_space<vmem>>, vector<64x16xf32>
      %20 = vector.extract_strided_slice %14 {offsets = [0, 0], sizes = [64, 1], strides = [1, 1]} : vector<64x3xf32> to vector<64x1xf32>
      %21 = vector.broadcast %20 : vector<64x1xf32> to vector<64x16xf32>
      %22 = arith.mulf %19, %21 : vector<64x16xf32>
      %23 = arith.truncf %22 : vector<64x16xf32> to vector<64x16xbf16>
      %c0_20 = arith.constant 0 : index
      %c0_21 = arith.constant 0 : index
      %c0_22 = arith.constant 0 : index
      %24 = vector.load %arg6[%c0_20, %c0_21, %c0_22] : memref<4x16x128xbf16, #tpu.memory_space<vmem>>, vector<1x16x128xbf16>
      %25 = vector.shape_cast %24 : vector<1x16x128xbf16> to vector<16x128xbf16>
      %cst_23 = arith.constant dense<0.000000e+00> : vector<64x128xf32>
      %26 = tpu.matmul %23, %25, %cst_23 {dimension_numbers = #tpu.dot_dimension_numbers<[1], [0], [0], [1], [0, 0, 1, 1], [], []>} : vector<64x16xbf16>, vector<16x128xbf16>, vector<64x128xf32> -> vector<64x128xf32>
      %27 = arith.addf %18, %26 : vector<64x128xf32>
      %c64 = arith.constant 64 : index
      %c0_24 = arith.constant 0 : index
      %28 = vector.load %arg9[%c64, %c0_24] : memref<192x16xf32, #tpu.memory_space<vmem>>, vector<64x16xf32>
      %29 = vector.extract_strided_slice %14 {offsets = [0, 1], sizes = [64, 1], strides = [1, 1]} : vector<64x3xf32> to vector<64x1xf32>
      %30 = vector.broadcast %29 : vector<64x1xf32> to vector<64x16xf32>
      %31 = arith.mulf %28, %30 : vector<64x16xf32>
      %32 = arith.truncf %31 : vector<64x16xf32> to vector<64x16xbf16>
      %c1 = arith.constant 1 : index
      %c0_25 = arith.constant 0 : index
      %c0_26 = arith.constant 0 : index
      %33 = vector.load %arg6[%c1, %c0_25, %c0_26] : memref<4x16x128xbf16, #tpu.memory_space<vmem>>, vector<1x16x128xbf16>
      %34 = vector.shape_cast %33 : vector<1x16x128xbf16> to vector<16x128xbf16>
      %cst_27 = arith.constant dense<0.000000e+00> : vector<64x128xf32>
      %35 = tpu.matmul %32, %34, %cst_27 {dimension_numbers = #tpu.dot_dimension_numbers<[1], [0], [0], [1], [0, 0, 1, 1], [], []>} : vector<64x16xbf16>, vector<16x128xbf16>, vector<64x128xf32> -> vector<64x128xf32>
      %36 = arith.addf %27, %35 : vector<64x128xf32>
      %c128 = arith.constant 128 : index
      %c0_28 = arith.constant 0 : index
      %37 = vector.load %arg9[%c128, %c0_28] : memref<192x16xf32, #tpu.memory_space<vmem>>, vector<64x16xf32>
      %38 = vector.extract_strided_slice %14 {offsets = [0, 2], sizes = [64, 1], strides = [1, 1]} : vector<64x3xf32> to vector<64x1xf32>
      %39 = vector.broadcast %38 : vector<64x1xf32> to vector<64x16xf32>
      %40 = arith.mulf %37, %39 : vector<64x16xf32>
      %41 = arith.truncf %40 : vector<64x16xf32> to vector<64x16xbf16>
      %c2 = arith.constant 2 : index
      %c0_29 = arith.constant 0 : index
      %c0_30 = arith.constant 0 : index
      %42 = vector.load %arg6[%c2, %c0_29, %c0_30] : memref<4x16x128xbf16, #tpu.memory_space<vmem>>, vector<1x16x128xbf16>
      %43 = vector.shape_cast %42 : vector<1x16x128xbf16> to vector<16x128xbf16>
      %cst_31 = arith.constant dense<0.000000e+00> : vector<64x128xf32>
      %44 = tpu.matmul %41, %43, %cst_31 {dimension_numbers = #tpu.dot_dimension_numbers<[1], [0], [0], [1], [0, 0, 1, 1], [], []>} : vector<64x16xbf16>, vector<16x128xbf16>, vector<64x128xf32> -> vector<64x128xf32>
      %45 = arith.addf %36, %44 : vector<64x128xf32>
      %c0_32 = arith.constant 0 : index
      %c0_33 = arith.constant 0 : index
      %46 = vector.load %arg7[%c0_32, %c0_33] : memref<1x128xf32, #tpu.memory_space<vmem>>, vector<1x128xf32>
      %47 = vector.broadcast %46 : vector<1x128xf32> to vector<64x128xf32>
      %48 = arith.addf %45, %47 : vector<64x128xf32>
      %cst_34 = arith.constant 0.000000e+00 : f32
      %49 = vector.broadcast %cst_34 : f32 to vector<64x128xf32>
      %50 = arith.maximumf %48, %49 : vector<64x128xf32>
      %c0_35 = arith.constant 0 : index
      %c0_36 = arith.constant 0 : index
      %51 = vector.load %arg8[%c0_35, %c0_36] : memref<64x128xf32, #tpu.memory_space<vmem>>, vector<64x128xf32>
      tpu.vector_store %arg8[%c0_35, %c0_36], %50 {strides = array<i32>} : memref<64x128xf32, #tpu.memory_space<vmem>>, vector<64x128xf32>,
    } else {
    }
    return
  }
  func.func @transform_0(%arg0: i32, %arg1: i32) -> (i32, i32, i32) {
    %c0_i32 = arith.constant 0 : i32
    %c0_i32_0 = arith.constant 0 : i32
    return %c0_i32, %arg0, %arg1 : i32, i32, i32
  }
  func.func @transform_1(%arg0: i32, %arg1: i32) -> (i32, i32) {
    %c0_i32 = arith.constant 0 : i32
    %c0_i32_0 = arith.constant 0 : i32
    return %arg1, %c0_i32 : i32, i32
  }
  func.func @transform_2(%arg0: i32, %arg1: i32) -> (i32, i32) {
    %c0_i32 = arith.constant 0 : i32
    %c0_i32_0 = arith.constant 0 : i32
    return %arg0, %c0_i32 : i32, i32
  }
  func.func @transform_3(%arg0: i32, %arg1: i32) -> (i32, i32) {
    %c0_i32 = arith.constant 0 : i32
    %c0_i32_0 = arith.constant 0 : i32
    return %arg0, %c0_i32 : i32, i32
  }
  func.func @transform_4(%arg0: i32, %arg1: i32) -> (i32, i32, i32) {
    %c0_i32 = arith.constant 0 : i32
    %c0_i32_0 = arith.constant 0 : i32
    %c0_i32_1 = arith.constant 0 : i32
    %c0_i32_2 = arith.constant 0 : i32
    return %c0_i32, %c0_i32_0, %c0_i32_1 : i32, i32, i32
  }
  func.func @transform_5(%arg0: i32, %arg1: i32) -> (i32, i32) {
    %c0_i32 = arith.constant 0 : i32
    %c0_i32_0 = arith.constant 0 : i32
    %c0_i32_1 = arith.constant 0 : i32
    return %c0_i32, %c0_i32_0 : i32, i32
  }
  func.func @transform_6(%arg0: i32, %arg1: i32) -> (i32, i32) {
    %c0_i32 = arith.constant 0 : i32
    %c0_i32_0 = arith.constant 0 : i32
    return %arg0, %c0_i32 : i32, i32
  }
}

</mosaic_0001>

<llo_original>
// kernel: tpu_custom_call.1
$region0: #{tpu_custom_call.1}
  #allocation0 [shape = 'u32[]', space=smem, size = 0x4, offset = 0x4, fixed_abs, tag = 'smem constant byte address 0x4 - core index']
  #allocation1 [shape = 'u32[72,128]{1,0:T(1,128)}', space=vmem, size = 0x9000, scoped, tag = 'internal scratch']
  #allocation2 [shape = 'f32[192,16]{1,0:T(8,128)}', space=vmem, size = 0x18000, scoped, tag = 'scratch operand']
  %s0 = inlined_call_operand.vmem [shape: s8[3,128,128], index: 0, kind: input, shape index: {}]
  %s1 = inlined_call_operand.vmem [shape: bf16[128,16], index: 1, kind: input, shape index: {}]
  %s2 = inlined_call_operand.vmem [shape: bf16[128,16], index: 2, kind: input, shape index: {}]
  %s3 = inlined_call_operand.vmem [shape: f32[128,3], index: 3, kind: input, shape index: {}]
  %s4 = inlined_call_operand.vmem [shape: bf16[4,16,128], index: 4, kind: input, shape index: {}]
  %s5 = inlined_call_operand.vmem [shape: f32[1,128], index: 5, kind: input, shape index: {}]
  %s6 = inlined_call_operand.hbm [shape: f32[128,128], index: 6, kind: output, shape index: {}]
  %s7 = sld [smem:[#allocation0]]
  $region103: #{tpu_custom_call.1} parent=0
    _
  %s9 = ssub.s32 1, %s7
  %s10 = scalar_select 0, %s9, %s7
  $region1: #{tpu_custom_call.1} parent=0
    #allocation3 [shape = 'u8[49152]{0}', space=vmem, size = 0xc000, scoped, tag = 'input window, operand 0']
    #allocation4 [shape = 'u8[65536]{0}', space=vmem, size = 0x10000, scoped, tag = 'output window, operand 0']
    #allocation5 [shape = 's32[2]{0}', space=sflag, size = 0x8, scoped, tag = 'scoped memory for tpu_custom_call.1']
    %11 = vsyncpa [#allocation5], 0
    %s12 = scalar_lea.sflag [#allocation5], 1
    %13 = vsyncpa %s12, 0
    loop: start=0, step=1, limit=4
    $region2: #{tpu_custom_call.1} parent=1 // loop_pre_header
      _
    $region3: #{tpu_custom_call.1} parent=1 // loop_header
      %s15 = sphi 0, %s19
      %p16 = scmp.ge.s32.totalorder %s15, 4
      %s22 = sphi 0, %s34
      %s23 = sphi 0, %s30
      %s24 = sphi 0, %s22
      %s25 = sphi 0, %s23
      %s26 = sphi 0, %s24
      %s27 = sphi 0, %s25
      %s39 = sphi 0, %s41
      %s42 = sphi 0, %s39
      %s43 = sphi 0, %s42
      %s59 = sphi 0, %s43
      %s65 = sphi 0, %s67
      %s68 = sphi 0, %s65
      %s69 = sphi 0, %s68
      %s85 = sphi 0, %s69
      %s91 = sphi 0, %s93
      %s94 = sphi 0, %s91
      %s95 = sphi 0, %s94
      %s111 = sphi 0, %s95
      %s117 = sphi 0, %s119
      %s120 = sphi 0, %s117
      %s121 = sphi 0, %s120
      %s137 = sphi 0, %s121
      %s141 = sphi 0, %s141
      %s143 = sphi 0, %s141
      %s144 = sphi 0, %s143
      %s158 = sphi 0, %s144
      %s162 = sphi 0, %s162
      %s164 = sphi 0, %s162
      %s165 = sphi 0, %s164
      %s179 = sphi 0, %s165
      %s185 = sphi 0, %s187
      %s188 = sphi 0, %s185
      %s189 = sphi 0, %s188
      %s205 = sphi 0, %s189
    $region4: #{tpu_custom_call.1} parent=1 // loop_header_branch
      %18 = sbr.rel (%p16) target = $region8
    $region5: #{tpu_custom_call.1} parent=1 // loop_body
      %s20 = ssub.s32 %s15, 1
      %s21 = ssub.s32 %s15, 2
      %s28 = sadd.s32 1, %s23
      %p29 = scmp.ge.s32.totalorder %s28, 1
      %s30 = scalar_select %p29, 0, %s28
      %s31 = sadd.s32 1, %s22
      %s32 = scalar_select %p29, %s31, %s22
      %p33 = scmp.ge.s32.totalorder %s32, 2
      %s34 = scalar_select %p33, 0, %s32
      %s35 = ssub.s32 %s22, %s34
      %s36 = ssub.s32 %s23, %s30
      %s37 = sor.u32 %s35, %s36
      %p38 = scmp.eq.s32.totalorder %s37, 0
      %s40 = sadd.s32 %s39, 1
      %s41 = scalar_select %p38, %s39, %s40
      %p44 = pneg %p38
      %p45 = scmp.eq.s32.totalorder %s15, 1
      %p46 = por %p44, %p45
      %p47 = scmp.ne.s32.totalorder %s39, %s42
      %p48 = scmp.eq.s32.totalorder %s15, 0
      %p49 = por %p47, %p48
      %p50 = scmp.ne.s32.totalorder %s39, %s42
      %p51 = scmp.eq.s32.totalorder %s20, 1
      %p52 = por %p50, %p51
      %p53 = scmp.ne.s32.totalorder %s42, %s43
      %p54 = scmp.eq.s32.totalorder %s20, 0
      %p55 = por %p53, %p54
      %p56 = scmp.ne.s32.totalorder %s42, %s43
      %p57 = scmp.eq.s32.totalorder %s21, 1
      %p58 = por %p56, %p57
      %p60 = scmp.ne.s32.totalorder %s43, %s59
      %p61 = scmp.eq.s32.totalorder %s21, 0
      %p62 = por %p60, %p61
      %s63 = ssub.s32 %s23, %s30
      %p64 = scmp.eq.s32.totalorder %s63, 0
      %s66 = sadd.s32 %s65, 1
      %s67 = scalar_select %p64, %s65, %s66
      %p70 = pneg %p64
      %p71 = scmp.eq.s32.totalorder %s15, 1
      %p72 = por %p70, %p71
      %p73 = scmp.ne.s32.totalorder %s65, %s68
      %p74 = scmp.eq.s32.totalorder %s15, 0
      %p75 = por %p73, %p74
      %p76 = scmp.ne.s32.totalorder %s65, %s68
      %p77 = scmp.eq.s32.totalorder %s20, 1
      %p78 = por %p76, %p77
      %p79 = scmp.ne.s32.totalorder %s68, %s69
      %p80 = scmp.eq.s32.totalorder %s20, 0
      %p81 = por %p79, %p80
      %p82 = scmp.ne.s32.totalorder %s68, %s69
      %p83 = scmp.eq.s32.totalorder %s21, 1
      %p84 = por %p82, %p83
      %p86 = scmp.ne.s32.totalorder %s69, %s85
      %p87 = scmp.eq.s32.totalorder %s21, 0
      %p88 = por %p86, %p87
      %s89 = ssub.s32 %s22, %s34
      %p90 = scmp.eq.s32.totalorder %s89, 0
      %s92 = sadd.s32 %s91, 1
      %s93 = scalar_select %p90, %s91, %s92
      %p96 = pneg %p90
      %p97 = scmp.eq.s32.totalorder %s15, 1
      %p98 = por %p96, %p97
      %p99 = scmp.ne.s32.totalorder %s91, %s94
      %p100 = scmp.eq.s32.totalorder %s15, 0
      %p101 = por %p99, %p100
      %p102 = scmp.ne.s32.totalorder %s91, %s94
      %p103 = scmp.eq.s32.totalorder %s20, 1
      %p104 = por %p102, %p103
      %p105 = scmp.ne.s32.totalorder %s94, %s95
      %p106 = scmp.eq.s32.totalorder %s20, 0
      %p107 = por %p105, %p106
      %p108 = scmp.ne.s32.totalorder %s94, %s95
      %p109 = scmp.eq.s32.totalorder %s21, 1
      %p110 = por %p108, %p109
      %p112 = scmp.ne.s32.totalorder %s95, %s111
      %p113 = scmp.eq.s32.totalorder %s21, 0
      %p114 = por %p112, %p113
      %s115 = ssub.s32 %s22, %s34
      %p116 = scmp.eq.s32.totalorder %s115, 0
      %s118 = sadd.s32 %s117, 1
      %s119 = scalar_select %p116, %s117, %s118
      %p122 = pneg %p116
      %p123 = scmp.eq.s32.totalorder %s15, 1
      %p124 = por %p122, %p123
      %p125 = scmp.ne.s32.totalorder %s117, %s120
      %p126 = scmp.eq.s32.totalorder %s15, 0
      %p127 = por %p125, %p126
      %p128 = scmp.ne.s32.totalorder %s117, %s120
      %p129 = scmp.eq.s32.totalorder %s20, 1
      %p130 = por %p128, %p129
      %p131 = scmp.ne.s32.totalorder %s120, %s121
      %p132 = scmp.eq.s32.totalorder %s20, 0
      %p133 = por %p131, %p132
      %p134 = scmp.ne.s32.totalorder %s120, %s121
      %p135 = scmp.eq.s32.totalorder %s21, 1
      %p136 = por %p134, %p135
      %p138 = scmp.ne.s32.totalorder %s121, %s137
      %p139 = scmp.eq.s32.totalorder %s21, 0
      %p140 = por %p138, %p139
      %s142 = sadd.s32 %s141, 1
      %p145 = scmp.eq.s32.totalorder %s15, 1
      %p146 = scmp.ne.s32.totalorder %s141, %s143
      %p147 = scmp.eq.s32.totalorder %s15, 0
      %p148 = por %p146, %p147
      %p149 = scmp.ne.s32.totalorder %s141, %s143
      %p150 = scmp.eq.s32.totalorder %s20, 1
      %p151 = por %p149, %p150
      %p152 = scmp.ne.s32.totalorder %s143, %s144
      %p153 = scmp.eq.s32.totalorder %s20, 0
      %p154 = por %p152, %p153
      %p155 = scmp.ne.s32.totalorder %s143, %s144
      %p156 = scmp.eq.s32.totalorder %s21, 1
      %p157 = por %p155, %p156
      %p159 = scmp.ne.s32.totalorder %s144, %s158
      %p160 = scmp.eq.s32.totalorder %s21, 0
      %p161 = por %p159, %p160
      %s163 = sadd.s32 %s162, 1
      %p166 = scmp.eq.s32.totalorder %s15, 1
      %p167 = scmp.ne.s32.totalorder %s162, %s164
      %p168 = scmp.eq.s32.totalorder %s15, 0
      %p169 = por %p167, %p168
      %p170 = scmp.ne.s32.totalorder %s162, %s164
      %p171 = scmp.eq.s32.totalorder %s20, 1
      %p172 = por %p170, %p171
      %p173 = scmp.ne.s32.totalorder %s164, %s165
      %p174 = scmp.eq.s32.totalorder %s20, 0
      %p175 = por %p173, %p174
      %p176 = scmp.ne.s32.totalorder %s164, %s165
      %p177 = scmp.eq.s32.totalorder %s21, 1
      %p178 = por %p176, %p177
      %p180 = scmp.ne.s32.totalorder %s165, %s179
      %p181 = scmp.eq.s32.totalorder %s21, 0
      %p182 = por %p180, %p181
      %s183 = ssub.s32 %s22, %s34
      %p184 = scmp.eq.s32.totalorder %s183, 0
      %s186 = sadd.s32 %s185, 1
      %s187 = scalar_select %p184, %s185, %s186
      %p190 = pneg %p184
      %p191 = scmp.eq.s32.totalorder %s15, 1
      %p192 = por %p190, %p191
      %p193 = scmp.ne.s32.totalorder %s185, %s188
      %p194 = scmp.eq.s32.totalorder %s15, 0
      %p195 = por %p193, %p194
      %p196 = scmp.ne.s32.totalorder %s185, %s188
      %p197 = scmp.eq.s32.totalorder %s20, 1
      %p198 = por %p196, %p197
      %p199 = scmp.ne.s32.totalorder %s188, %s189
      %p200 = scmp.eq.s32.totalorder %s20, 0
      %p201 = por %p199, %p200
      %p202 = scmp.ne.s32.totalorder %s188, %s189
      %p203 = scmp.eq.s32.totalorder %s21, 1
      %p204 = por %p202, %p203
      %p206 = scmp.ne.s32.totalorder %s189, %s205
      %p207 = scmp.eq.s32.totalorder %s21, 0
      %p208 = por %p206, %p207
      %p209 = scmp.le.s32.totalorder 1, %s15
      %p210 = scmp.lt.s32.totalorder %s15, 3
      %p211 = pnand %p209, %p210
      %p212 = pneg %p211
      // Predicated region
      $region9: #{tpu_custom_call.1} parent=5 // pred_check
        _
      $region10: #{tpu_custom_call.1} parent=5 // pred_check_branch
        %214 = sbr.rel (%p211) target = $region12
      $region11: #{tpu_custom_call.1} parent=5 // pred_region
        %s215 = ssub.s32 %s15, 1
        // Predicated region
        $region13: #{tpu_custom_call.1} parent=11 // pred_check
          %p216 = pneg %p81
        $region14: #{tpu_custom_call.1} parent=11 // pred_check_branch
          %218 = sbr.rel (%p216) target = $region16
        $region15: #{tpu_custom_call.1} parent=11 // pred_region
          %s219 = smul.u32 16, %s25
          %p220 = scmp.lt.s32.totalorder %s219, 15
          %s221 = scalar_select %p220, %s219, 15
          %s222 = smul.addr %s221, 4
          %s223 = scalar_lea.vmem %s1, %s222
          %s224 = smul.u32 16, %s25
        $region16: #{tpu_custom_call.1} parent=11 // pred_fallthru
          _
        // Predicated region
        $region17: #{tpu_custom_call.1} parent=11 // pred_check
          %p225 = pneg %p154
        $region18: #{tpu_custom_call.1} parent=11 // pred_check_branch
          %227 = sbr.rel (%p225) target = $region20
        $region19: #{tpu_custom_call.1} parent=11 // pred_region
          _
        $region20: #{tpu_custom_call.1} parent=11 // pred_fallthru
          _
        // Predicated region
        $region21: #{tpu_custom_call.1} parent=11 // pred_check
          %p228 = pneg %p175
        $region22: #{tpu_custom_call.1} parent=11 // pred_check_branch
          %230 = sbr.rel (%p228) target = $region24
        $region23: #{tpu_custom_call.1} parent=11 // pred_region
          _
        $region24: #{tpu_custom_call.1} parent=11 // pred_fallthru
          _
      $region12: #{tpu_custom_call.1} parent=5 // pred_fallthru
        _
      %p231 = scmp.lt.s32.totalorder %s15, 2
      // Predicated region
      $region25: #{tpu_custom_call.1} parent=5 // pred_check
        %p232 = pneg %p231
      $region26: #{tpu_custom_call.1} parent=5 // pred_check_branch
        %234 = sbr.rel (%p232) target = $region28
      $region27: #{tpu_custom_call.1} parent=5 // pred_region
        // Predicated region
        $region29: #{tpu_custom_call.1} parent=27 // pred_check
          %p235 = pneg %p49
        $region30: #{tpu_custom_call.1} parent=27 // pred_check_branch
          %237 = sbr.rel (%p235) target = $region32
        $region31: #{tpu_custom_call.1} parent=27 // pred_region
          %s238 = sand.u32 %s39, 1
          %s239 = sand.u32 %s39, 1
          %s240 = smul.addr %s239, 48
          %s241 = scalar_lea.vmem [#allocation3], %s240
          %s242 = smul.u32 2, %s22
          %s243 = sadd.s32 %s23, %s242
          %s244 = smul.addr %s243, 8
          %s245 = scalar_lea.vmem %s0, %s244
          // Predicated region
          $region33: #{tpu_custom_call.1} parent=31 // pred_check
            _
          $region34: #{tpu_custom_call.1} parent=31 // pred_check_branch
            %247 = sbr.rel (0) target = $region36
          $region35: #{tpu_custom_call.1} parent=31 // pred_region
            // Predicated region
            $region37: #{tpu_custom_call.1} parent=35 // pred_check
              _
            $region38: #{tpu_custom_call.1} parent=35 // pred_check_branch
              %249 = sbr.rel (0) target = $region40
            $region39: #{tpu_custom_call.1} parent=35 // pred_region
              // Predicated region
              $region52: #{tpu_custom_call.1} parent=39 // pred_check
                _
              $region53: #{tpu_custom_call.1} parent=39 // pred_check_branch
                %275 = sbr.rel (0) target = $region55
              $region54: #{tpu_custom_call.1} parent=39 // pred_region
                loop: start=0, step=1, limit=1
                $region56: #{tpu_custom_call.1} parent=54 // loop_pre_header
                  _
                $region57: #{tpu_custom_call.1} parent=54 // loop_header
                  %s277 = sphi 0, %s281
                  %p278 = scmp.ge.s32.totalorder %s277, 1
                  %s282 = sphi %s245, %s245
                  %s283 = sphi %s241, %s241
                $region58: #{tpu_custom_call.1} parent=54 // loop_header_branch
                  %280 = sbr.rel (%p278) target = $region62
                $region59: #{tpu_custom_call.1} parent=54 // loop_body
                  %v284 = vld [vmem:[%s282] sm:$0xff]
                  %285 = vst [vmem:[%s283] sm:$0xff] %v284
                  %v286 = vld [vmem:[%s282 + $0x8] sm:$0xff]
                  %287 = vst [vmem:[%s283 + $0x8] sm:$0xff] %v286
                  %v288 = vld [vmem:[%s282 + $0x20] sm:$0xff]
                  %289 = vst [vmem:[%s283 + $0x10] sm:$0xff] %v288
                  %v290 = vld [vmem:[%s282 + $0x28] sm:$0xff]
                  %291 = vst [vmem:[%s283 + $0x18] sm:$0xff] %v290
                  %v292 = vld [vmem:[%s282 + $0x40] sm:$0xff]
                  %293 = vst [vmem:[%s283 + $0x20] sm:$0xff] %v292
                  %v294 = vld [vmem:[%s282 + $0x48] sm:$0xff]
                  %295 = vst [vmem:[%s283 + $0x28] sm:$0xff] %v294
                $region60: #{tpu_custom_call.1} parent=54 // loop_footer
                  %s281 = sadd.s32 1, %s277
                $region61: #{tpu_custom_call.1} parent=54 // loop_footer_branch
                  %276 = sbr.rel target = $region57
                $region62: #{tpu_custom_call.1} parent=54 // loop_exit
                  _
              $region55: #{tpu_custom_call.1} parent=39 // pred_fallthru
                _
              // Predicated region
              $region63: #{tpu_custom_call.1} parent=39 // pred_check
                _
              $region64: #{tpu_custom_call.1} parent=39 // pred_check_branch
                %297 = sbr.rel target = $region66
              $region65: #{tpu_custom_call.1} parent=39 // pred_region
                _
              $region66: #{tpu_custom_call.1} parent=39 // pred_fallthru
                _
            $region40: #{tpu_custom_call.1} parent=35 // pred_fallthru
              _
            // Predicated region
            $region41: #{tpu_custom_call.1} parent=35 // pred_check
              _
            $region42: #{tpu_custom_call.1} parent=35 // pred_check_branch
              %251 = sbr.rel target = $region44
            $region43: #{tpu_custom_call.1} parent=35 // pred_region
              %s253 = ssub.s32 256, 1
              loop: start=0, step=1, limit=1
              $region45: #{tpu_custom_call.1} parent=43 // loop_pre_header
                _
              $region46: #{tpu_custom_call.1} parent=43 // loop_header
                %s255 = sphi 0, %s259
                %p256 = scmp.ge.s32.totalorder %s255, 1
                %s260 = sphi %s245, %s245
                %s261 = sphi %s241, %s241
              $region47: #{tpu_custom_call.1} parent=43 // loop_header_branch
                %258 = sbr.rel (%p256) target = $region51
              $region48: #{tpu_custom_call.1} parent=43 // loop_body
                %v262 = vld [vmem:[%s260] sm:%s253]
                %263 = vst [vmem:[%s261] sm:%s253] %v262
                %v264 = vld [vmem:[%s260 + $0x8] sm:%s253]
                %265 = vst [vmem:[%s261 + $0x8] sm:%s253] %v264
                %v266 = vld [vmem:[%s260 + $0x20] sm:%s253]
                %267 = vst [vmem:[%s261 + $0x10] sm:%s253] %v266
                %v268 = vld [vmem:[%s260 + $0x28] sm:%s253]
                %269 = vst [vmem:[%s261 + $0x18] sm:%s253] %v268
                %v270 = vld [vmem:[%s260 + $0x40] sm:%s253]
                %271 = vst [vmem:[%s261 + $0x20] sm:%s253] %v270
                %v272 = vld [vmem:[%s260 + $0x48] sm:%s253]
                %273 = vst [vmem:[%s261 + $0x28] sm:%s253] %v272
              $region49: #{tpu_custom_call.1} parent=43 // loop_footer
                %s259 = sadd.s32 1, %s255
              $region50: #{tpu_custom_call.1} parent=43 // loop_footer_branch
                %254 = sbr.rel target = $region46
              $region51: #{tpu_custom_call.1} parent=43 // loop_exit
                _
            $region44: #{tpu_custom_call.1} parent=35 // pred_fallthru
              _
          $region36: #{tpu_custom_call.1} parent=31 // pred_fallthru
            _
          %298 = vnop
        $region32: #{tpu_custom_call.1} parent=27 // pred_fallthru
          _
        // Predicated region
        $region67: #{tpu_custom_call.1} parent=27 // pred_check
          %p299 = pneg %p101
        $region68: #{tpu_custom_call.1} parent=27 // pred_check_branch
          %301 = sbr.rel (%p299) target = $region70
        $region69: #{tpu_custom_call.1} parent=27 // pred_region
          %s302 = smul.u32 8, %s22
          %p303 = scmp.lt.s32.totalorder %s302, 15
          %s304 = scalar_select %p303, %s302, 15
          %s305 = smul.addr %s304, 4
          %s306 = scalar_lea.vmem %s2, %s305
          %s307 = smul.u32 8, %s22
        $region70: #{tpu_custom_call.1} parent=27 // pred_fallthru
          _
        // Predicated region
        $region71: #{tpu_custom_call.1} parent=27 // pred_check
          %p308 = pneg %p127
        $region72: #{tpu_custom_call.1} parent=27 // pred_check_branch
          %310 = sbr.rel (%p308) target = $region74
        $region73: #{tpu_custom_call.1} parent=27 // pred_region
          %s311 = smul.u32 8, %s22
          %p312 = scmp.lt.s32.totalorder %s311, 15
          %s313 = scalar_select %p312, %s311, 15
          %s314 = smul.addr %s313, 8
          %s315 = scalar_lea.vmem %s3, %s314
          %s316 = smul.u32 8, %s22
        $region74: #{tpu_custom_call.1} parent=27 // pred_fallthru
          _
      $region28: #{tpu_custom_call.1} parent=5 // pred_fallthru
        _
      %p317 = scmp.le.s32.totalorder 1, %s15
      %p318 = scmp.lt.s32.totalorder %s15, 3
      %p319 = pnand %p317, %p318
      %p320 = pneg %p319
      // Predicated region
      $region75: #{tpu_custom_call.1} parent=5 // pred_check
        _
      $region76: #{tpu_custom_call.1} parent=5 // pred_check_branch
        %322 = sbr.rel (%p319) target = $region78
      $region77: #{tpu_custom_call.1} parent=5 // pred_region
        %s323 = ssub.s32 %s15, 1
        %s324 = sand.u32 %s42, 1
        %s325 = sand.u32 %s42, 1
        %s326 = smul.addr %s325, 48
        %s327 = scalar_lea.vmem [#allocation3], %s326
        // Predicated region
        $region79: #{tpu_custom_call.1} parent=77 // pred_check
          %p328 = pneg %p55
        $region80: #{tpu_custom_call.1} parent=77 // pred_check_branch
          %330 = sbr.rel (%p328) target = $region82
        $region81: #{tpu_custom_call.1} parent=77 // pred_region
          _
        $region82: #{tpu_custom_call.1} parent=77 // pred_fallthru
          _
        %s331 = sand.u32 %s42, 1
        %s332 = sand.u32 %s42, 1
        %s333 = smul.addr %s332, 48
        %s334 = scalar_lea.vmem [#allocation3], %s333
        %p335 = pneg %p55
        %p336 = pneg %p52
        %s337 = smul.u32 16, %s25
        %p338 = scmp.lt.s32.totalorder %s337, 15
        %s339 = scalar_select %p338, %s337, 15
        %s340 = smul.addr %s339, 4
        %s341 = scalar_lea.vmem %s1, %s340
        %p342 = pneg %p81
        %p343 = pneg %p78
        %s344 = smul.u32 8, %s24
        %p345 = scmp.lt.s32.totalorder %s344, 15
        %s346 = scalar_select %p345, %s344, 15
        %s347 = smul.addr %s346, 4
        %s348 = scalar_lea.vmem %s2, %s347
        %p349 = pneg %p107
        %p350 = pneg %p104
        %s351 = smul.u32 8, %s24
        %p352 = scmp.lt.s32.totalorder %s351, 15
        %s353 = scalar_select %p352, %s351, 15
        %s354 = smul.addr %s353, 8
        %s355 = scalar_lea.vmem %s3, %s354
        %p356 = pneg %p133
        %p357 = pneg %p130
        %p358 = pneg %p154
        %p359 = pneg %p151
        %p360 = pneg %p175
        %p361 = pneg %p172
        %p362 = pneg %p201
        %p363 = pneg %p198
        %s364 = sand.u32 %s188, 1
        %s365 = scalar_lea.sflag [#allocation5], %s364
        %s366 = sand.u32 %s188, 1
        %s367 = smul.addr %s366, 64
        %s368 = scalar_lea.vmem [#allocation4], %s367
        %s369 = smul.u32 2, %s24
        %s370 = smul.u32 16, %s25
        %p371 = scmp.lt.s32.totalorder %s370, 15
        %s372 = scalar_select %p371, %s370, 15
        %s373 = smul.addr %s372, 4
        %s374 = scalar_lea.vmem %s1, %s373
        %s375 = smul.u32 16, %s25
        %s376 = smul.u32 8, %s24
        %p377 = scmp.lt.s32.totalorder %s376, 15
        %s378 = scalar_select %p377, %s376, 15
        %s379 = smul.addr %s378, 4
        %s380 = scalar_lea.vmem %s2, %s379
        %s381 = smul.u32 8, %s24
        %s382 = smul.u32 8, %s24
        %p383 = scmp.lt.s32.totalorder %s382, 15
        %s384 = scalar_select %p383, %s382, 15
        %s385 = smul.addr %s384, 8
        %s386 = scalar_lea.vmem %s3, %s385
        %s387 = smul.u32 8, %s24
        %s388 = smul.u32 8, %s24
        %p390 = scmp.eq.s32.totalorder %s25, 0
        // Predicated region
        $region83: #{tpu_custom_call.1} parent=77 // pred_check
          %p391 = pneg %p390
        $region84: #{tpu_custom_call.1} parent=77 // pred_check_branch
          %393 = sbr.rel (%p391) target = $region86
        $region85: #{tpu_custom_call.1} parent=77 // pred_region
          %vm394 = vcmask 130048
          %395 = vst.msk [vmem:[#allocation2] sm:$0xff] %vm394, 0.0
          %396 = vst.msk [vmem:[#allocation2 + $0x8] sm:$0xff] %vm394, 0.0
          %397 = vst.msk [vmem:[#allocation2 + $0x10] sm:$0xff] %vm394, 0.0
          %398 = vst.msk [vmem:[#allocation2 + $0x18] sm:$0xff] %vm394, 0.0
          %399 = vst.msk [vmem:[#allocation2 + $0x20] sm:$0xff] %vm394, 0.0
          %400 = vst.msk [vmem:[#allocation2 + $0x28] sm:$0xff] %vm394, 0.0
          %401 = vst.msk [vmem:[#allocation2 + $0x30] sm:$0xff] %vm394, 0.0
          %402 = vst.msk [vmem:[#allocation2 + $0x38] sm:$0xff] %vm394, 0.0
          %403 = vst.msk [vmem:[#allocation2 + $0x40] sm:$0xff] %vm394, 0.0
          %404 = vst.msk [vmem:[#allocation2 + $0x48] sm:$0xff] %vm394, 0.0
          %405 = vst.msk [vmem:[#allocation2 + $0x50] sm:$0xff] %vm394, 0.0
          %406 = vst.msk [vmem:[#allocation2 + $0x58] sm:$0xff] %vm394, 0.0
          %407 = vst.msk [vmem:[#allocation2 + $0x60] sm:$0xff] %vm394, 0.0
          %408 = vst.msk [vmem:[#allocation2 + $0x68] sm:$0xff] %vm394, 0.0
          %409 = vst.msk [vmem:[#allocation2 + $0x70] sm:$0xff] %vm394, 0.0
          %410 = vst.msk [vmem:[#allocation2 + $0x78] sm:$0xff] %vm394, 0.0
          %411 = vst.msk [vmem:[#allocation2 + $0x80] sm:$0xff] %vm394, 0.0
          %412 = vst.msk [vmem:[#allocation2 + $0x88] sm:$0xff] %vm394, 0.0
          %413 = vst.msk [vmem:[#allocation2 + $0x90] sm:$0xff] %vm394, 0.0
          %414 = vst.msk [vmem:[#allocation2 + $0x98] sm:$0xff] %vm394, 0.0
          %415 = vst.msk [vmem:[#allocation2 + $0xa0] sm:$0xff] %vm394, 0.0
          %416 = vst.msk [vmem:[#allocation2 + $0xa8] sm:$0xff] %vm394, 0.0
          %417 = vst.msk [vmem:[#allocation2 + $0xb0] sm:$0xff] %vm394, 0.0
          %418 = vst.msk [vmem:[#allocation2 + $0xb8] sm:$0xff] %vm394, 0.0
        $region86: #{tpu_custom_call.1} parent=77 // pred_fallthru
          _
        %v419 = vld [vmem:[%s327] sm:$0xff]
        %v420 = vld [vmem:[%s327 + $0x8] sm:$0xff]
        %v421 = vld [vmem:[%s327 + $0x10] sm:$0xff]
        %v422 = vld [vmem:[%s327 + $0x18] sm:$0xff]
        %v423 = vld [vmem:[%s327 + $0x20] sm:$0xff]
        %v424 = vld [vmem:[%s327 + $0x28] sm:$0xff]
        %v425 = vunpack.c.0.s8 %v419
        %v426 = vunpack.c.1.s8 %v419
        %v427 = vunpack.c.2.s8 %v419
        %v428 = vunpack.c.3.s8 %v419
        %v429 = vunpack.c.0.s8 %v420
        %v430 = vunpack.c.1.s8 %v420
        %v431 = vunpack.c.2.s8 %v420
        %v432 = vunpack.c.3.s8 %v420
        %v433 = vunpack.c.0.s8 %v421
        %v434 = vunpack.c.1.s8 %v421
        %v435 = vunpack.c.2.s8 %v421
        %v436 = vunpack.c.3.s8 %v421
        %v437 = vunpack.c.0.s8 %v422
        %v438 = vunpack.c.1.s8 %v422
        %v439 = vunpack.c.2.s8 %v422
        %v440 = vunpack.c.3.s8 %v422
        %v441 = vunpack.c.0.s8 %v423
        %v442 = vunpack.c.1.s8 %v423
        %v443 = vunpack.c.2.s8 %v423
        %v444 = vunpack.c.3.s8 %v423
        %v445 = vunpack.c.0.s8 %v424
        %v446 = vunpack.c.1.s8 %v424
        %v447 = vunpack.c.2.s8 %v424
        %v448 = vunpack.c.3.s8 %v424
        %v449 = vcvt.s32.f32 %v425
        %v450 = vcvt.s32.f32 %v426
        %v451 = vcvt.s32.f32 %v427
        %v452 = vcvt.s32.f32 %v428
        %v453 = vcvt.s32.f32 %v429
        %v454 = vcvt.s32.f32 %v430
        %v455 = vcvt.s32.f32 %v431
        %v456 = vcvt.s32.f32 %v432
        %v457 = vcvt.s32.f32 %v433
        %v458 = vcvt.s32.f32 %v434
        %v459 = vcvt.s32.f32 %v435
        %v460 = vcvt.s32.f32 %v436
        %v461 = vcvt.s32.f32 %v437
        %v462 = vcvt.s32.f32 %v438
        %v463 = vcvt.s32.f32 %v439
        %v464 = vcvt.s32.f32 %v440
        %v465 = vcvt.s32.f32 %v441
        %v466 = vcvt.s32.f32 %v442
        %v467 = vcvt.s32.f32 %v443
        %v468 = vcvt.s32.f32 %v444
        %v469 = vcvt.s32.f32 %v445
        %v470 = vcvt.s32.f32 %v446
        %v471 = vcvt.s32.f32 %v447
        %v472 = vcvt.s32.f32 %v448
        %v473 = vpack.c.bf16 %v449, %v449
        %v474 = vpack.c.bf16 %v450, %v450
        %v475 = vpack.c.bf16 %v451, %v451
        %v476 = vpack.c.bf16 %v452, %v452
        %v477 = vpack.c.bf16 %v453, %v453
        %v478 = vpack.c.bf16 %v454, %v454
        %v479 = vpack.c.bf16 %v455, %v455
        %v480 = vpack.c.bf16 %v456, %v456
        %v481 = vpack.c.bf16 %v457, %v457
        %v482 = vpack.c.bf16 %v458, %v458
        %v483 = vpack.c.bf16 %v459, %v459
        %v484 = vpack.c.bf16 %v460, %v460
        %v485 = vpack.c.bf16 %v461, %v461
        %v486 = vpack.c.bf16 %v462, %v462
        %v487 = vpack.c.bf16 %v463, %v463
        %v488 = vpack.c.bf16 %v464, %v464
        %v489 = vpack.c.bf16 %v465, %v465
        %v490 = vpack.c.bf16 %v466, %v466
        %v491 = vpack.c.bf16 %v467, %v467
        %v492 = vpack.c.bf16 %v468, %v468
        %v493 = vpack.c.bf16 %v469, %v469
        %v494 = vpack.c.bf16 %v470, %v470
        %v495 = vpack.c.bf16 %v471, %v471
        %v496 = vpack.c.bf16 %v472, %v472
        %v497 = vld [vmem:[#allocation2] sm:$0xff]
        %v498 = vld [vmem:[#allocation2 + $0x8] sm:$0xff]
        %v499 = vld [vmem:[#allocation2 + $0x10] sm:$0xff]
        %v500 = vld [vmem:[#allocation2 + $0x18] sm:$0xff]
        %v501 = vld [vmem:[#allocation2 + $0x20] sm:$0xff]
        %v502 = vld [vmem:[#allocation2 + $0x28] sm:$0xff]
        %v503 = vld [vmem:[#allocation2 + $0x30] sm:$0xff]
        %v504 = vld [vmem:[#allocation2 + $0x38] sm:$0xff]
        %v505 = vld [vmem:[#allocation2 + $0x40] sm:$0xff]
        %v506 = vld [vmem:[#allocation2 + $0x48] sm:$0xff]
        %v507 = vld [vmem:[#allocation2 + $0x50] sm:$0xff]
        %v508 = vld [vmem:[#allocation2 + $0x58] sm:$0xff]
        %v509 = vld [vmem:[#allocation2 + $0x60] sm:$0xff]
        %v510 = vld [vmem:[#allocation2 + $0x68] sm:$0xff]
        %v511 = vld [vmem:[#allocation2 + $0x70] sm:$0xff]
        %v512 = vld [vmem:[#allocation2 + $0x78] sm:$0xff]
        %v513 = vld [vmem:[#allocation2 + $0x80] sm:$0xff]
        %v514 = vld [vmem:[#allocation2 + $0x88] sm:$0xff]
        %v515 = vld [vmem:[#allocation2 + $0x90] sm:$0xff]
        %v516 = vld [vmem:[#allocation2 + $0x98] sm:$0xff]
        %v517 = vld [vmem:[#allocation2 + $0xa0] sm:$0xff]
        %v518 = vld [vmem:[#allocation2 + $0xa8] sm:$0xff]
        %v519 = vld [vmem:[#allocation2 + $0xb0] sm:$0xff]
        %v520 = vld [vmem:[#allocation2 + $0xb8] sm:$0xff]
        %v521 = vld [vmem:[%s374] sm:$0xf]
        %v522 = vld [vmem:[%s374 + $0x4] sm:$0xf]
        %v523 = vld [vmem:[%s374 + $0x8] sm:$0xf]
        %v524 = vld [vmem:[%s374 + $0xc] sm:$0xf]
        %v525 = vld [vmem:[%s374 + $0x10] sm:$0xf]
        %v526 = vld [vmem:[%s374 + $0x14] sm:$0xf]
        %v527 = vld [vmem:[%s374 + $0x18] sm:$0xf]
        %v528 = vld [vmem:[%s374 + $0x1c] sm:$0xf]
        %v529 = vld [vmem:[%s374 + $0x20] sm:$0xf]
        %v530 = vld [vmem:[%s374 + $0x24] sm:$0xf]
        %v531 = vld [vmem:[%s374 + $0x28] sm:$0xf]
        %v532 = vld [vmem:[%s374 + $0x2c] sm:$0xf]
        %v533 = vld [vmem:[%s374 + $0x30] sm:$0xf]
        %v534 = vld [vmem:[%s374 + $0x34] sm:$0xf]
        %v535 = vld [vmem:[%s374 + $0x38] sm:$0xf]
        %v536 = vld [vmem:[%s374 + $0x3c] sm:$0xf]
        %v561 = vunpack.c.l.b16 %v473
        %v562 = vunpack.c.l.b16 %v474
        %v563 = vunpack.c.l.b16 %v475
        %v564 = vunpack.c.l.b16 %v476
        %v565 = vunpack.c.l.b16 %v477
        %v566 = vunpack.c.l.b16 %v478
        %v567 = vunpack.c.l.b16 %v479
        %v568 = vunpack.c.l.b16 %v480
        %v569 = vunpack.c.l.b16 %v481
        %v570 = vunpack.c.l.b16 %v482
        %v571 = vunpack.c.l.b16 %v483
        %v572 = vunpack.c.l.b16 %v484
        %v573 = vunpack.c.l.b16 %v485
        %v574 = vunpack.c.l.b16 %v486
        %v575 = vunpack.c.l.b16 %v487
        %v576 = vunpack.c.l.b16 %v488
        %v577 = vunpack.c.l.b16 %v489
        %v578 = vunpack.c.l.b16 %v490
        %v579 = vunpack.c.l.b16 %v491
        %v580 = vunpack.c.l.b16 %v492
        %v581 = vunpack.c.l.b16 %v493
        %v582 = vunpack.c.l.b16 %v494
        %v583 = vunpack.c.l.b16 %v495
        %v584 = vunpack.c.l.b16 %v496
        %v585 = vpack.c.b16 %v562, %v561
        %v586 = vpack.c.b16 %v564, %v563
        %v587 = vpack.c.b16 %v566, %v565
        %v588 = vpack.c.b16 %v568, %v567
        %v589 = vpack.c.b16 %v570, %v569
        %v590 = vpack.c.b16 %v572, %v571
        %v591 = vpack.c.b16 %v574, %v573
        %v592 = vpack.c.b16 %v576, %v575
        %v593 = vpack.c.b16 %v578, %v577
        %v594 = vpack.c.b16 %v580, %v579
        %v595 = vpack.c.b16 %v582, %v581
        %v596 = vpack.c.b16 %v584, %v583
        %v625 = vunpack.c.l.b16 %v521
        %v626 = vunpack.c.l.b16 %v522
        %v627 = vunpack.c.l.b16 %v523
        %v628 = vunpack.c.l.b16 %v524
        %v629 = vunpack.c.l.b16 %v525
        %v630 = vunpack.c.l.b16 %v526
        %v631 = vunpack.c.l.b16 %v527
        %v632 = vunpack.c.l.b16 %v528
        %v633 = vunpack.c.l.b16 %v529
        %v634 = vunpack.c.l.b16 %v530
        %v635 = vunpack.c.l.b16 %v531
        %v636 = vunpack.c.l.b16 %v532
        %v637 = vunpack.c.l.b16 %v533
        %v638 = vunpack.c.l.b16 %v534
        %v639 = vunpack.c.l.b16 %v535
        %v640 = vunpack.c.l.b16 %v536
        %v641 = vpack.c.b16 %v626, %v625
        %v642 = vpack.c.b16 %v628, %v627
        %v643 = vpack.c.b16 %v630, %v629
        %v644 = vpack.c.b16 %v632, %v631
        %v645 = vpack.c.b16 %v634, %v633
        %v646 = vpack.c.b16 %v636, %v635
        %v647 = vpack.c.b16 %v638, %v637
        %v648 = vpack.c.b16 %v640, %v639
        %657 = vmatpush.bf16.msra.mxu0 %v648
        %658 = vmatpush.bf16.msra.mxu0 %v647
        %659 = vmatpush.bf16.msra.mxu0 %v646
        %660 = vmatpush.bf16.msra.mxu0 %v645
        %661 = vmatpush.bf16.msra.mxu0 %v644
        %662 = vmatpush.bf16.msra.mxu0 %v643
        %663 = vmatpush.bf16.msra.mxu0 %v642
        %664 = vmatpush.bf16.msra.mxu0 %v641
        %665 = vmatmul.bf16.gmra.mxu0 %v585
        %v666 = vpop.f32.mrf.mxu0
        %v667 = vadd.f32 0.0, %v666
        %v668 = vpop.f32.mrf.mxu0
        %v669 = vadd.f32 0.0, %v668
        %670 = vmatmul.bf16.gmra.mxu0 %v586
        %v671 = vpop.f32.mrf.mxu0
        %v672 = vadd.f32 0.0, %v671
        %v673 = vpop.f32.mrf.mxu0
        %v674 = vadd.f32 0.0, %v673
        %675 = vmatmul.bf16.gmra.mxu0 %v587
        %v676 = vpop.f32.mrf.mxu0
        %v677 = vadd.f32 0.0, %v676
        %v678 = vpop.f32.mrf.mxu0
        %v679 = vadd.f32 0.0, %v678
        %680 = vmatmul.bf16.gmra.mxu0 %v588
        %v681 = vpop.f32.mrf.mxu0
        %v682 = vadd.f32 0.0, %v681
        %v683 = vpop.f32.mrf.mxu0
        %v684 = vadd.f32 0.0, %v683
        %685 = vmatmul.bf16.gmra.mxu0 %v589
        %v686 = vpop.f32.mrf.mxu0
        %v687 = vadd.f32 0.0, %v686
        %v688 = vpop.f32.mrf.mxu0
        %v689 = vadd.f32 0.0, %v688
        %690 = vmatmul.bf16.gmra.mxu0 %v590
        %v691 = vpop.f32.mrf.mxu0
        %v692 = vadd.f32 0.0, %v691
        %v693 = vpop.f32.mrf.mxu0
        %v694 = vadd.f32 0.0, %v693
        %695 = vmatmul.bf16.gmra.mxu0 %v591
        %v696 = vpop.f32.mrf.mxu0
        %v697 = vadd.f32 0.0, %v696
        %v698 = vpop.f32.mrf.mxu0
        %v699 = vadd.f32 0.0, %v698
        %700 = vmatmul.bf16.gmra.mxu0 %v592
        %v701 = vpop.f32.mrf.mxu0
        %v702 = vadd.f32 0.0, %v701
        %v703 = vpop.f32.mrf.mxu0
        %v704 = vadd.f32 0.0, %v703
        %705 = vmatmul.bf16.gmra.mxu0 %v593
        %v706 = vpop.f32.mrf.mxu0
        %v707 = vadd.f32 0.0, %v706
        %v708 = vpop.f32.mrf.mxu0
        %v709 = vadd.f32 0.0, %v708
        %710 = vmatmul.bf16.gmra.mxu0 %v594
        %v711 = vpop.f32.mrf.mxu0
        %v712 = vadd.f32 0.0, %v711
        %v713 = vpop.f32.mrf.mxu0
        %v714 = vadd.f32 0.0, %v713
        %715 = vmatmul.bf16.gmra.mxu0 %v595
        %v716 = vpop.f32.mrf.mxu0
        %v717 = vadd.f32 0.0, %v716
        %v718 = vpop.f32.mrf.mxu0
        %v719 = vadd.f32 0.0, %v718
        %720 = vmatmul.bf16.gmra.mxu0 %v596
        %v721 = vpop.f32.mrf.mxu0
        %v722 = vadd.f32 0.0, %v721
        %v723 = vpop.f32.mrf.mxu0
        %v724 = vadd.f32 0.0, %v723
        %725 = vdwg.mxu0
        %v726 = vadd.f32 %v497, %v667
        %v727 = vadd.f32 %v498, %v669
        %v728 = vadd.f32 %v499, %v672
        %v729 = vadd.f32 %v500, %v674
        %v730 = vadd.f32 %v501, %v677
        %v731 = vadd.f32 %v502, %v679
        %v732 = vadd.f32 %v503, %v682
        %v733 = vadd.f32 %v504, %v684
        %v734 = vadd.f32 %v505, %v687
        %v735 = vadd.f32 %v506, %v689
        %v736 = vadd.f32 %v507, %v692
        %v737 = vadd.f32 %v508, %v694
        %v738 = vadd.f32 %v509, %v697
        %v739 = vadd.f32 %v510, %v699
        %v740 = vadd.f32 %v511, %v702
        %v741 = vadd.f32 %v512, %v704
        %v742 = vadd.f32 %v513, %v707
        %v743 = vadd.f32 %v514, %v709
        %v744 = vadd.f32 %v515, %v712
        %v745 = vadd.f32 %v516, %v714
        %v746 = vadd.f32 %v517, %v717
        %v747 = vadd.f32 %v518, %v719
        %v748 = vadd.f32 %v519, %v722
        %v749 = vadd.f32 %v520, %v724
        %vm750 = vcmask 130048
        %751 = vst.msk [vmem:[#allocation2] sm:$0xff] %vm750, %v726
        %752 = vst.msk [vmem:[#allocation2 + $0x8] sm:$0xff] %vm750, %v727
        %753 = vst.msk [vmem:[#allocation2 + $0x10] sm:$0xff] %vm750, %v728
        %754 = vst.msk [vmem:[#allocation2 + $0x18] sm:$0xff] %vm750, %v729
        %755 = vst.msk [vmem:[#allocation2 + $0x20] sm:$0xff] %vm750, %v730
        %756 = vst.msk [vmem:[#allocation2 + $0x28] sm:$0xff] %vm750, %v731
        %757 = vst.msk [vmem:[#allocation2 + $0x30] sm:$0xff] %vm750, %v732
        %758 = vst.msk [vmem:[#allocation2 + $0x38] sm:$0xff] %vm750, %v733
        %759 = vst.msk [vmem:[#allocation2 + $0x40] sm:$0xff] %vm750, %v734
        %760 = vst.msk [vmem:[#allocation2 + $0x48] sm:$0xff] %vm750, %v735
        %761 = vst.msk [vmem:[#allocation2 + $0x50] sm:$0xff] %vm750, %v736
        %762 = vst.msk [vmem:[#allocation2 + $0x58] sm:$0xff] %vm750, %v737
        %763 = vst.msk [vmem:[#allocation2 + $0x60] sm:$0xff] %vm750, %v738
        %764 = vst.msk [vmem:[#allocation2 + $0x68] sm:$0xff] %vm750, %v739
        %765 = vst.msk [vmem:[#allocation2 + $0x70] sm:$0xff] %vm750, %v740
        %766 = vst.msk [vmem:[#allocation2 + $0x78] sm:$0xff] %vm750, %v741
        %767 = vst.msk [vmem:[#allocation2 + $0x80] sm:$0xff] %vm750, %v742
        %768 = vst.msk [vmem:[#allocation2 + $0x88] sm:$0xff] %vm750, %v743
        %769 = vst.msk [vmem:[#allocation2 + $0x90] sm:$0xff] %vm750, %v744
        %770 = vst.msk [vmem:[#allocation2 + $0x98] sm:$0xff] %vm750, %v745
        %771 = vst.msk [vmem:[#allocation2 + $0xa0] sm:$0xff] %vm750, %v746
        %772 = vst.msk [vmem:[#allocation2 + $0xa8] sm:$0xff] %vm750, %v747
        %773 = vst.msk [vmem:[#allocation2 + $0xb0] sm:$0xff] %vm750, %v748
        %774 = vst.msk [vmem:[#allocation2 + $0xb8] sm:$0xff] %vm750, %v749
        // Predicated region
        $region87: #{tpu_custom_call.1} parent=77 // pred_check
          %p775 = pneg %p390
        $region88: #{tpu_custom_call.1} parent=77 // pred_check_branch
          %777 = sbr.rel (%p775) target = $region90
        $region89: #{tpu_custom_call.1} parent=77 // pred_region
          %v778 = vld [vmem:[%s386] sm:$0xff]
          %v779 = vld [vmem:[%s386 + $0x8] sm:$0xff]
          %v780 = vld [vmem:[%s386 + $0x10] sm:$0xff]
          %v781 = vld [vmem:[%s386 + $0x18] sm:$0xff]
          %v782 = vld [vmem:[%s386 + $0x20] sm:$0xff]
          %v783 = vld [vmem:[%s386 + $0x28] sm:$0xff]
          %v784 = vld [vmem:[%s386 + $0x30] sm:$0xff]
          %v785 = vld [vmem:[%s386 + $0x38] sm:$0xff]
          %v786 = vld [vmem:[%s380] sm:$0xf]
          %v787 = vld [vmem:[%s380 + $0x4] sm:$0xf]
          %v788 = vld [vmem:[%s380 + $0x8] sm:$0xf]
          %v789 = vld [vmem:[%s380 + $0xc] sm:$0xf]
          %v790 = vld [vmem:[%s380 + $0x10] sm:$0xf]
          %v791 = vld [vmem:[%s380 + $0x14] sm:$0xf]
          %v792 = vld [vmem:[%s380 + $0x18] sm:$0xf]
          %v793 = vld [vmem:[%s380 + $0x1c] sm:$0xf]
          %s794 = scalar_lea.vmem %s4, 24
          %v795 = vld [vmem:[%s794] sm:$0xf]
          %v796 = vld [vmem:[%s794 + $0x4] sm:$0xf]
          %v797 = vld [vmem:[#allocation2] sm:$0xff]
          %v798 = vld [vmem:[#allocation2 + $0x8] sm:$0xff]
          %v799 = vld [vmem:[#allocation2 + $0x10] sm:$0xff]
          %v800 = vld [vmem:[#allocation2 + $0x18] sm:$0xff]
          %v801 = vld [vmem:[#allocation2 + $0x20] sm:$0xff]
          %v802 = vld [vmem:[#allocation2 + $0x28] sm:$0xff]
          %v803 = vld [vmem:[#allocation2 + $0x30] sm:$0xff]
          %v804 = vld [vmem:[#allocation2 + $0x38] sm:$0xff]
          %806 = vset.pattern.permute.xlu0 0
          %807 = vperm.xlu0 %806, %v778
          %v808 = vpop.permute.xlu0 %807
          %811 = vset.pattern.permute.xlu0 0
          %812 = vperm.xlu0 %811, %v779
          %v813 = vpop.permute.xlu0 %812
          %816 = vset.pattern.permute.xlu0 0
          %817 = vperm.xlu0 %816, %v780
          %v818 = vpop.permute.xlu0 %817
          %821 = vset.pattern.permute.xlu0 0
          %822 = vperm.xlu0 %821, %v781
          %v823 = vpop.permute.xlu0 %822
          %826 = vset.pattern.permute.xlu0 0
          %827 = vperm.xlu0 %826, %v782
          %v828 = vpop.permute.xlu0 %827
          %831 = vset.pattern.permute.xlu0 0
          %832 = vperm.xlu0 %831, %v783
          %v833 = vpop.permute.xlu0 %832
          %836 = vset.pattern.permute.xlu0 0
          %837 = vperm.xlu0 %836, %v784
          %v838 = vpop.permute.xlu0 %837
          %841 = vset.pattern.permute.xlu0 0
          %842 = vperm.xlu0 %841, %v785
          %v843 = vpop.permute.xlu0 %842
          %v845 = vmul.f32 %v797, %v808
          %v846 = vmul.f32 %v798, %v813
          %v847 = vmul.f32 %v799, %v818
          %v848 = vmul.f32 %v800, %v823
          %v849 = vmul.f32 %v801, %v828
          %v850 = vmul.f32 %v802, %v833
          %v851 = vmul.f32 %v803, %v838
          %v852 = vmul.f32 %v804, %v843
          %v853 = vpack.c.bf16 %v846, %v845
          %v854 = vpack.c.bf16 %v848, %v847
          %v855 = vpack.c.bf16 %v850, %v849
          %v856 = vpack.c.bf16 %v852, %v851
          %v857 = vld [vmem:[%s4] sm:$0xf]
          %v858 = vld [vmem:[%s4 + $0x4] sm:$0xf]
          %v861 = vunpack.c.l.b16 %v857
          %v862 = vunpack.c.l.b16 %v858
          %v863 = vpack.c.b16 %v862, %v861
          %v866 = vsel %vm750, %v853, 0
          %v869 = vsel %vm750, %v854, 0
          %v872 = vsel %vm750, %v855, 0
          %v875 = vsel %vm750, %v856, 0
          %877 = vmatpush.bf16.msra.mxu0 0
          %878 = vmatpush.bf16.msra.mxu0 0
          %879 = vmatpush.bf16.msra.mxu0 0
          %880 = vmatpush.bf16.msra.mxu0 0
          %881 = vmatpush.bf16.msra.mxu0 0
          %882 = vmatpush.bf16.msra.mxu0 0
          %883 = vmatpush.bf16.msra.mxu0 0
          %884 = vmatpush.bf16.msra.mxu0 %v863
          %885 = vmatmul.bf16.gmra.mxu0 %v866
          %v886 = vpop.f32.mrf.mxu0
          %v887 = vadd.f32 0.0, %v886
          %v888 = vpop.f32.mrf.mxu0
          %v889 = vadd.f32 0.0, %v888
          %890 = vmatmul.bf16.gmra.mxu0 %v869
          %v891 = vpop.f32.mrf.mxu0
          %v892 = vadd.f32 0.0, %v891
          %v893 = vpop.f32.mrf.mxu0
          %v894 = vadd.f32 0.0, %v893
          %895 = vmatmul.bf16.gmra.mxu0 %v872
          %v896 = vpop.f32.mrf.mxu0
          %v897 = vadd.f32 0.0, %v896
          %v898 = vpop.f32.mrf.mxu0
          %v899 = vadd.f32 0.0, %v898
          %900 = vmatmul.bf16.gmra.mxu0 %v875
          %v901 = vpop.f32.mrf.mxu0
          %v902 = vadd.f32 0.0, %v901
          %v903 = vpop.f32.mrf.mxu0
          %v904 = vadd.f32 0.0, %v903
          %905 = vdwg.mxu0
          %v914 = vunpack.c.l.b16 %v786
          %v915 = vunpack.c.l.b16 %v787
          %v916 = vunpack.c.l.b16 %v788
          %v917 = vunpack.c.l.b16 %v789
          %v918 = vunpack.c.l.b16 %v790
          %v919 = vunpack.c.l.b16 %v791
          %v920 = vunpack.c.l.b16 %v792
          %v921 = vunpack.c.l.b16 %v793
          %v922 = vpack.c.b16 %v915, %v914
          %v923 = vpack.c.b16 %v917, %v916
          %v924 = vpack.c.b16 %v919, %v918
          %v925 = vpack.c.b16 %v921, %v920
          %v928 = vunpack.c.l.b16 %v795
          %v929 = vunpack.c.l.b16 %v796
          %v930 = vpack.c.b16 %v929, %v928
          %v933 = vsel %vm750, %v922, 0
          %v936 = vsel %vm750, %v923, 0
          %v939 = vsel %vm750, %v924, 0
          %v942 = vsel %vm750, %v925, 0
          %944 = vmatpush.bf16.msra.mxu0 0
          %945 = vmatpush.bf16.msra.mxu0 0
          %946 = vmatpush.bf16.msra.mxu0 0
          %947 = vmatpush.bf16.msra.mxu0 0
          %948 = vmatpush.bf16.msra.mxu0 0
          %949 = vmatpush.bf16.msra.mxu0 0
          %950 = vmatpush.bf16.msra.mxu0 0
          %951 = vmatpush.bf16.msra.mxu0 %v930
          %952 = vmatmul.bf16.gmra.mxu0 %v933
          %v953 = vpop.f32.mrf.mxu0
          %v954 = vadd.f32 %v887, %v953
          %v955 = vpop.f32.mrf.mxu0
          %v956 = vadd.f32 %v889, %v955
          %957 = vmatmul.bf16.gmra.mxu0 %v936
          %v958 = vpop.f32.mrf.mxu0
          %v959 = vadd.f32 %v892, %v958
          %v960 = vpop.f32.mrf.mxu0
          %v961 = vadd.f32 %v894, %v960
          %962 = vmatmul.bf16.gmra.mxu0 %v939
          %v963 = vpop.f32.mrf.mxu0
          %v964 = vadd.f32 %v897, %v963
          %v965 = vpop.f32.mrf.mxu0
          %v966 = vadd.f32 %v899, %v965
          %967 = vmatmul.bf16.gmra.mxu0 %v942
          %v968 = vpop.f32.mrf.mxu0
          %v969 = vadd.f32 %v902, %v968
          %v970 = vpop.f32.mrf.mxu0
          %v971 = vadd.f32 %v904, %v970
          %972 = vdwg.mxu0
          %v973 = vld [vmem:[#allocation2 + $0x40] sm:$0xff]
          %v974 = vld [vmem:[#allocation2 + $0x48] sm:$0xff]
          %v975 = vld [vmem:[#allocation2 + $0x50] sm:$0xff]
          %v976 = vld [vmem:[#allocation2 + $0x58] sm:$0xff]
          %v977 = vld [vmem:[#allocation2 + $0x60] sm:$0xff]
          %v978 = vld [vmem:[#allocation2 + $0x68] sm:$0xff]
          %v979 = vld [vmem:[#allocation2 + $0x70] sm:$0xff]
          %v980 = vld [vmem:[#allocation2 + $0x78] sm:$0xff]
          %981 = vset.pattern.permute.xlu0 1
          %982 = vperm.xlu0 %981, %v778
          %v983 = vpop.permute.xlu0 %982
          %985 = vset.pattern.permute.xlu0 1
          %986 = vperm.xlu0 %985, %v779
          %v987 = vpop.permute.xlu0 %986
          %989 = vset.pattern.permute.xlu0 1
          %990 = vperm.xlu0 %989, %v780
          %v991 = vpop.permute.xlu0 %990
          %993 = vset.pattern.permute.xlu0 1
          %994 = vperm.xlu0 %993, %v781
          %v995 = vpop.permute.xlu0 %994
          %997 = vset.pattern.permute.xlu0 1
          %998 = vperm.xlu0 %997, %v782
          %v999 = vpop.permute.xlu0 %998
          %1001 = vset.pattern.permute.xlu0 1
          %1002 = vperm.xlu0 %1001, %v783
          %v1003 = vpop.permute.xlu0 %1002
          %1005 = vset.pattern.permute.xlu0 1
          %1006 = vperm.xlu0 %1005, %v784
          %v1007 = vpop.permute.xlu0 %1006
          %1009 = vset.pattern.permute.xlu0 1
          %1010 = vperm.xlu0 %1009, %v785
          %v1011 = vpop.permute.xlu0 %1010
          %v1013 = vmul.f32 %v973, %v983
          %v1014 = vmul.f32 %v974, %v987
          %v1015 = vmul.f32 %v975, %v991
          %v1016 = vmul.f32 %v976, %v995
          %v1017 = vmul.f32 %v977, %v999
          %v1018 = vmul.f32 %v978, %v1003
          %v1019 = vmul.f32 %v979, %v1007
          %v1020 = vmul.f32 %v980, %v1011
          %v1021 = vpack.c.bf16 %v1014, %v1013
          %v1022 = vpack.c.bf16 %v1016, %v1015
          %v1023 = vpack.c.bf16 %v1018, %v1017
          %v1024 = vpack.c.bf16 %v1020, %v1019
          %s1025 = scalar_lea.vmem %s4, 8
          %v1026 = vld [vmem:[%s1025] sm:$0xf]
          %v1027 = vld [vmem:[%s1025 + $0x4] sm:$0xf]
          %v1030 = vunpack.c.l.b16 %v1026
          %v1031 = vunpack.c.l.b16 %v1027
          %v1032 = vpack.c.b16 %v1031, %v1030
          %v1035 = vsel %vm750, %v1021, 0
          %v1038 = vsel %vm750, %v1022, 0
          %v1041 = vsel %vm750, %v1023, 0
          %v1044 = vsel %vm750, %v1024, 0
          %1046 = vmatpush.bf16.msra.mxu0 0
          %1047 = vmatpush.bf16.msra.mxu0 0
          %1048 = vmatpush.bf16.msra.mxu0 0
          %1049 = vmatpush.bf16.msra.mxu0 0
          %1050 = vmatpush.bf16.msra.mxu0 0
          %1051 = vmatpush.bf16.msra.mxu0 0
          %1052 = vmatpush.bf16.msra.mxu0 0
          %1053 = vmatpush.bf16.msra.mxu0 %v1032
          %1054 = vmatmul.bf16.gmra.mxu0 %v1035
          %v1055 = vpop.f32.mrf.mxu0
          %v1056 = vadd.f32 0.0, %v1055
          %v1057 = vpop.f32.mrf.mxu0
          %v1058 = vadd.f32 0.0, %v1057
          %1059 = vmatmul.bf16.gmra.mxu0 %v1038
          %v1060 = vpop.f32.mrf.mxu0
          %v1061 = vadd.f32 0.0, %v1060
          %v1062 = vpop.f32.mrf.mxu0
          %v1063 = vadd.f32 0.0, %v1062
          %1064 = vmatmul.bf16.gmra.mxu0 %v1041
          %v1065 = vpop.f32.mrf.mxu0
          %v1066 = vadd.f32 0.0, %v1065
          %v1067 = vpop.f32.mrf.mxu0
          %v1068 = vadd.f32 0.0, %v1067
          %1069 = vmatmul.bf16.gmra.mxu0 %v1044
          %v1070 = vpop.f32.mrf.mxu0
          %v1071 = vadd.f32 0.0, %v1070
          %v1072 = vpop.f32.mrf.mxu0
          %v1073 = vadd.f32 0.0, %v1072
          %1074 = vdwg.mxu0
          %v1075 = vadd.f32 %v954, %v1056
          %v1076 = vadd.f32 %v956, %v1058
          %v1077 = vadd.f32 %v959, %v1061
          %v1078 = vadd.f32 %v961, %v1063
          %v1079 = vadd.f32 %v964, %v1066
          %v1080 = vadd.f32 %v966, %v1068
          %v1081 = vadd.f32 %v969, %v1071
          %v1082 = vadd.f32 %v971, %v1073
          %v1083 = vld [vmem:[#allocation2 + $0x80] sm:$0xff]
          %v1084 = vld [vmem:[#allocation2 + $0x88] sm:$0xff]
          %v1085 = vld [vmem:[#allocation2 + $0x90] sm:$0xff]
          %v1086 = vld [vmem:[#allocation2 + $0x98] sm:$0xff]
          %v1087 = vld [vmem:[#allocation2 + $0xa0] sm:$0xff]
          %v1088 = vld [vmem:[#allocation2 + $0xa8] sm:$0xff]
          %v1089 = vld [vmem:[#allocation2 + $0xb0] sm:$0xff]
          %v1090 = vld [vmem:[#allocation2 + $0xb8] sm:$0xff]
          %1091 = vset.pattern.permute.xlu0 2
          %1092 = vperm.xlu0 %1091, %v778
          %v1093 = vpop.permute.xlu0 %1092
          %1095 = vset.pattern.permute.xlu0 2
          %1096 = vperm.xlu0 %1095, %v779
          %v1097 = vpop.permute.xlu0 %1096
          %1099 = vset.pattern.permute.xlu0 2
          %1100 = vperm.xlu0 %1099, %v780
          %v1101 = vpop.permute.xlu0 %1100
          %1103 = vset.pattern.permute.xlu0 2
          %1104 = vperm.xlu0 %1103, %v781
          %v1105 = vpop.permute.xlu0 %1104
          %1107 = vset.pattern.permute.xlu0 2
          %1108 = vperm.xlu0 %1107, %v782
          %v1109 = vpop.permute.xlu0 %1108
          %1111 = vset.pattern.permute.xlu0 2
          %1112 = vperm.xlu0 %1111, %v783
          %v1113 = vpop.permute.xlu0 %1112
          %1115 = vset.pattern.permute.xlu0 2
          %1116 = vperm.xlu0 %1115, %v784
          %v1117 = vpop.permute.xlu0 %1116
          %1119 = vset.pattern.permute.xlu0 2
          %1120 = vperm.xlu0 %1119, %v785
          %v1121 = vpop.permute.xlu0 %1120
          %v1123 = vmul.f32 %v1083, %v1093
          %v1124 = vmul.f32 %v1084, %v1097
          %v1125 = vmul.f32 %v1085, %v1101
          %v1126 = vmul.f32 %v1086, %v1105
          %v1127 = vmul.f32 %v1087, %v1109
          %v1128 = vmul.f32 %v1088, %v1113
          %v1129 = vmul.f32 %v1089, %v1117
          %v1130 = vmul.f32 %v1090, %v1121
          %v1131 = vpack.c.bf16 %v1124, %v1123
          %v1132 = vpack.c.bf16 %v1126, %v1125
          %v1133 = vpack.c.bf16 %v1128, %v1127
          %v1134 = vpack.c.bf16 %v1130, %v1129
          %s1135 = scalar_lea.vmem %s4, 16
          %v1136 = vld [vmem:[%s1135] sm:$0xf]
          %v1137 = vld [vmem:[%s1135 + $0x4] sm:$0xf]
          %v1140 = vunpack.c.l.b16 %v1136
          %v1141 = vunpack.c.l.b16 %v1137
          %v1142 = vpack.c.b16 %v1141, %v1140
          %v1145 = vsel %vm750, %v1131, 0
          %v1148 = vsel %vm750, %v1132, 0
          %v1151 = vsel %vm750, %v1133, 0
          %v1154 = vsel %vm750, %v1134, 0
          %1156 = vmatpush.bf16.msra.mxu0 0
          %1157 = vmatpush.bf16.msra.mxu0 0
          %1158 = vmatpush.bf16.msra.mxu0 0
          %1159 = vmatpush.bf16.msra.mxu0 0
          %1160 = vmatpush.bf16.msra.mxu0 0
          %1161 = vmatpush.bf16.msra.mxu0 0
          %1162 = vmatpush.bf16.msra.mxu0 0
          %1163 = vmatpush.bf16.msra.mxu0 %v1142
          %1164 = vmatmul.bf16.gmra.mxu0 %v1145
          %v1165 = vpop.f32.mrf.mxu0
          %v1166 = vadd.f32 0.0, %v1165
          %v1167 = vpop.f32.mrf.mxu0
          %v1168 = vadd.f32 0.0, %v1167
          %1169 = vmatmul.bf16.gmra.mxu0 %v1148
          %v1170 = vpop.f32.mrf.mxu0
          %v1171 = vadd.f32 0.0, %v1170
          %v1172 = vpop.f32.mrf.mxu0
          %v1173 = vadd.f32 0.0, %v1172
          %1174 = vmatmul.bf16.gmra.mxu0 %v1151
          %v1175 = vpop.f32.mrf.mxu0
          %v1176 = vadd.f32 0.0, %v1175
          %v1177 = vpop.f32.mrf.mxu0
          %v1178 = vadd.f32 0.0, %v1177
          %1179 = vmatmul.bf16.gmra.mxu0 %v1154
          %v1180 = vpop.f32.mrf.mxu0
          %v1181 = vadd.f32 0.0, %v1180
          %v1182 = vpop.f32.mrf.mxu0
          %v1183 = vadd.f32 0.0, %v1182
          %1184 = vdwg.mxu0
          %v1185 = vadd.f32 %v1075, %v1166
          %v1186 = vadd.f32 %v1076, %v1168
          %v1187 = vadd.f32 %v1077, %v1171
          %v1188 = vadd.f32 %v1078, %v1173
          %v1189 = vadd.f32 %v1079, %v1176
          %v1190 = vadd.f32 %v1080, %v1178
          %v1191 = vadd.f32 %v1081, %v1181
          %v1192 = vadd.f32 %v1082, %v1183
          %v1193 = vld [vmem:[%s5] sm:$0x1]
          %v1195 = vperm.slane %v1193, 0
          %v1197 = vadd.f32 %v1185, %v1195
          %v1198 = vadd.f32 %v1186, %v1195
          %v1199 = vadd.f32 %v1187, %v1195
          %v1200 = vadd.f32 %v1188, %v1195
          %v1201 = vadd.f32 %v1189, %v1195
          %v1202 = vadd.f32 %v1190, %v1195
          %v1203 = vadd.f32 %v1191, %v1195
          %v1204 = vadd.f32 %v1192, %v1195
          %v1205 = vmax.f32 %v1197, 0.0
          %v1206 = vmax.f32 %v1198, 0.0
          %v1207 = vmax.f32 %v1199, 0.0
          %v1208 = vmax.f32 %v1200, 0.0
          %v1209 = vmax.f32 %v1201, 0.0
          %v1210 = vmax.f32 %v1202, 0.0
          %v1211 = vmax.f32 %v1203, 0.0
          %v1212 = vmax.f32 %v1204, 0.0
          %1213 = vst [vmem:[%s368] sm:$0xff] %v1205
          %1214 = vst [vmem:[%s368 + $0x8] sm:$0xff] %v1206
          %1215 = vst [vmem:[%s368 + $0x10] sm:$0xff] %v1207
          %1216 = vst [vmem:[%s368 + $0x18] sm:$0xff] %v1208
          %1217 = vst [vmem:[%s368 + $0x20] sm:$0xff] %v1209
          %1218 = vst [vmem:[%s368 + $0x28] sm:$0xff] %v1210
          %1219 = vst [vmem:[%s368 + $0x30] sm:$0xff] %v1211
          %1220 = vst [vmem:[%s368 + $0x38] sm:$0xff] %v1212
        $region90: #{tpu_custom_call.1} parent=77 // pred_fallthru
          _
        %s1221 = sand.u32 %s188, 1
        %s1222 = scalar_lea.sflag [#allocation5], %s1221
        %s1223 = sand.u32 %s188, 1
        %s1224 = smul.addr %s1223, 64
        %s1225 = scalar_lea.vmem [#allocation4], %s1224
        // Predicated region
        $region91: #{tpu_custom_call.1} parent=77 // pred_check
          %p1226 = pneg %p198
        $region92: #{tpu_custom_call.1} parent=77 // pred_check_branch
          %1228 = sbr.rel (%p1226) target = $region94
        $region93: #{tpu_custom_call.1} parent=77 // pred_region
          %s1229 = smul.u32 8, %s24
          %1231 = vsyncadd %s1222, 0
          %s1232 = smul.addr %s1229, 8
          %s1233 = scalar_lea.hbm %s6, %s1232
          %s1234 = sshll.u32 %s1225, 4
          %s1235 = int_to_ptr.vmem [resolvable:$true] %s1234
          %s1236 = sshll.u32 %s1233, 4
          %s1237 = int_to_ptr.hbm [resolvable:$true] %s1236
          %1242 = dma.vmem_to_hbm [thread:$0]  %s1235, 1024, %s1237, %s1222, 128, 128, 8
        $region94: #{tpu_custom_call.1} parent=77 // pred_fallthru
          _
      $region78: #{tpu_custom_call.1} parent=5 // pred_fallthru
        _
      %p1243 = scmp.le.s32.totalorder 2, %s15
      // Predicated region
      $region95: #{tpu_custom_call.1} parent=5 // pred_check
        %p1244 = pneg %p1243
      $region96: #{tpu_custom_call.1} parent=5 // pred_check_branch
        %1246 = sbr.rel (%p1244) target = $region98
      $region97: #{tpu_custom_call.1} parent=5 // pred_region
        %s1247 = ssub.s32 %s15, 2
        // Predicated region
        $region99: #{tpu_custom_call.1} parent=97 // pred_check
          %p1248 = pneg %p204
        $region100: #{tpu_custom_call.1} parent=97 // pred_check_branch
          %1250 = sbr.rel (%p1248) target = $region102
        $region101: #{tpu_custom_call.1} parent=97 // pred_region
          %s1251 = sand.u32 %s189, 1
          %s1252 = scalar_lea.sflag [#allocation5], %s1251
          %s1253 = sand.u32 %s189, 1
          %s1254 = smul.addr %s1253, 64
          %s1255 = scalar_lea.vmem [#allocation4], %s1254
          %1257 = dma.done %s1252, 1024
        $region102: #{tpu_custom_call.1} parent=97 // pred_fallthru
          _
      $region98: #{tpu_custom_call.1} parent=5 // pred_fallthru
        _
    $region6: #{tpu_custom_call.1} parent=1 // loop_footer
      %s19 = sadd.s32 1, %s15
    $region7: #{tpu_custom_call.1} parent=1 // loop_footer_branch
      %14 = sbr.rel target = $region3
    $region8: #{tpu_custom_call.1} parent=1 // loop_exit
      _
    %1258 = vsyncpa [#allocation5], 1
    %s1259 = scalar_lea.sflag [#allocation5], 1
    %1260 = vsyncpa %s1259, 1

</llo_original>
